<compile_context>
chip_gen: v7x
topology: tpu7x:2x2x1
jax: 0.10.0
libtpu: 0.0.40
codegen_flags: <defaults>
</compile_context>

<pallas_src>
import jax
import jax.numpy as jnp
from jax.experimental import pallas as pl
from jax.experimental.pallas import tpu as pltpu

LANE = 128


def _round_up(n, m):
    return ((n + m - 1) // m) * m


def _pad_axis(a, axis, multiple):
    pad = _round_up(a.shape[axis], multiple) - a.shape[axis]
    if pad == 0:
        return a
    cfg = [(0, 0)] * a.ndim
    cfg[axis] = (0, pad)
    return jnp.pad(a, cfg)


def _vmem_limit_bytes():
    # Raise the default scoped-VMEM limit where the chip allows it (v5e/v6e have
    # 128 MiB physical VMEM, v7x only 64 MiB); leave ~1/4 headroom, cap at 96 MiB.
    try:
        info = pltpu.get_tpu_info()
        cap = None
        for name in ("vmem_capacity_bytes", "vmem_bytes", "vmem_size_bytes"):
            cap = getattr(info, name, None)
            if cap:
                break
        if not cap:
            return None
        return int(min(96 * 2**20, (int(cap) * 3) // 4))
    except Exception:
        return None


_VMEM_LIMIT = _vmem_limit_bytes()


# ----------------------------------------------------------------------------
# Kernel 1: pointwise conv (1x1) + bias + ReLU + fused per-layer channel
# selection, as row-tiled MXU matmuls.  bf16 operands, f32 accumulation.
# Emits f_l (full padded feature, input to next stage) and g_l (dp selected
# lanes, the only thing the head consumes).
# ----------------------------------------------------------------------------
def _pw_conv_relu_sel_kernel(x_ref, w_ref, b_ref, s_ref, f_ref, g_ref):
    y = jnp.dot(x_ref[...], w_ref[...], preferred_element_type=jnp.float32)
    y = jnp.maximum(y + b_ref[...], 0.0)
    f_ref[...] = y.astype(f_ref.dtype)
    # one-hot channel selection (exact in bf16) at this layer's native resolution
    g_ref[...] = jnp.dot(y.astype(s_ref.dtype), s_ref[...],
                         preferred_element_type=jnp.float32).astype(g_ref.dtype)


def pw_conv_relu_sel(x_nhwc, w, b, sel, *, tile_rows=1024):
    """x:(B,H,W,Cin) bf16, w:(Cin,Cout) bf16, b:(Cout,) f32, sel:(Cout,dp) bf16.

    Cin/Cout/dp are 128-multiples.  Returns (f:(B,H,W,Cout) bf16, g:(B,H,W,dp) bf16).
    """
    B, H, W, Cin = x_nhwc.shape
    Cout = w.shape[1]
    dp = sel.shape[1]
    N = B * H * W

    # pick the largest row tile that divides N (no host-side pad copy needed);
    # fall back to cdiv-style padding only when no aligned divisor exists.
    tm = None
    for t in (tile_rows, 512, 256, 128, 64, 32, 16, 8):
        if t <= tile_rows and t <= N and t % 8 == 0 and N % t == 0:
            tm = t
            break
    if tm is None:
        tm = min(max(8, _round_up(tile_rows, 8)), _round_up(N, 8))
    Np = _round_up(N, tm)

    xf = x_nhwc.reshape(N, Cin)
    if Np != N:
        xf = jnp.pad(xf, ((0, Np - N), (0, 0)))

    f, g = pl.pallas_call(
        _pw_conv_relu_sel_kernel,
        out_shape=(jax.ShapeDtypeStruct((Np, Cout), jnp.bfloat16),
                   jax.ShapeDtypeStruct((Np, dp), jnp.bfloat16)),
        grid=(Np // tm,),
        in_specs=[
            pl.BlockSpec((tm, Cin), lambda i: (i, 0)),
            pl.BlockSpec((Cin, Cout), lambda i: (0, 0)),
            pl.BlockSpec((1, Cout), lambda i: (0, 0)),
            pl.BlockSpec((Cout, dp), lambda i: (0, 0)),
        ],
        out_specs=(pl.BlockSpec((tm, Cout), lambda i: (i, 0)),
                   pl.BlockSpec((tm, dp), lambda i: (i, 0))),
        compiler_params=pltpu.CompilerParams(
            dimension_semantics=("parallel",),
            vmem_limit_bytes=_VMEM_LIMIT),
    )(xf, w, b.reshape(1, Cout).astype(jnp.float32), sel)
    return f[:N].reshape(B, H, W, Cout), g[:N].reshape(B, H, W, dp)


def _avg_pool(x_nhwc, k):
    # glue: spatial average pooling (stands in for resnet's strided stages).
    # TODO(synk): fold this pool into the producing conv kernel (emit the pooled
    # map as a second kernel output) to drop one feature-map HBM round trip per
    # layer; kept host-side (on bf16 features) for lowering robustness.
    B, H, W, C = x_nhwc.shape
    p = x_nhwc.reshape(B, H // k, k, W // k, k, C).astype(jnp.float32).mean(axis=(2, 4))
    return p.astype(x_nhwc.dtype)


# ----------------------------------------------------------------------------
# Kernel 2: fused PaDiM head on the already-selected dp-lane features:
#   out = g1 + upsample_x2(g2) + upsample_x4(g3)
# W-upsample = small batched one-hot matmul over W only; H-upsample = broadcast
# along a new leading axis + leading-dim reshape (pure replication, no big
# one-hot matmuls, no large VMEM residents).  Accumulates directly into o_ref.
# ----------------------------------------------------------------------------
def padim_head(g1, g2, g3, *, th=None):
    B, H, W, dp = g1.shape
    _, H2, W2, _ = g2.shape
    _, H4, W4, _ = g3.shape
    assert H % 4 == 0 and W % 4 == 0
    assert H2 * 2 == H and W2 * 2 == W and H4 * 4 == H and W4 * 4 == W

    if th is None:
        cands = [t for t in (32, 16, 8, 4) if t <= H and H % t == 0 and t % 4 == 0]
        if not cands:                       # H % 4 == 0 guarantees 4 is valid
            cands = [4]
        # prefer an even total number of parallel steps (v7x: 2 TensorCores)
        even = [t for t in cands if (B * (H // t)) % 2 == 0]
        th = max(even) if even else max(cands)
    th2, th4 = th // 2, th // 4

    # one-hot W-only nearest-upsample matrices (tiny, exact in bf16)
    u2 = (jnp.arange(W)[:, None] // 2 == jnp.arange(W2)[None, :]).astype(jnp.bfloat16)
    u4 = (jnp.arange(W)[:, None] // 4 == jnp.arange(W4)[None, :]).astype(jnp.bfloat16)

    def head_kernel(u2_ref, u4_ref, g1_ref, g2_ref, g3_ref, o_ref):
        # layer1: selected channels pass straight through (already at output res)
        o_ref[0] = g1_ref[0].astype(jnp.float32)
        # layer2: x2 nearest upsample.  W via batched one-hot matmul, H via
        # broadcast + leading-dim reshape (no data-dependent MXU work).
        u2b = jnp.broadcast_to(u2_ref[...][None], (th2, W, W2))
        up2 = jnp.einsum("twv,tvd->twd", u2b, g2_ref[0],
                         preferred_element_type=jnp.float32)          # (th2, W, dp)
        up2 = jnp.broadcast_to(up2[:, None], (th2, 2, W, dp)).reshape(th, W, dp)
        o_ref[0] = o_ref[0] + up2
        # layer3: x4 nearest upsample.
        u4b = jnp.broadcast_to(u4_ref[...][None], (th4, W, W4))
        up3 = jnp.einsum("twv,tvd->twd", u4b, g3_ref[0],
                         preferred_element_type=jnp.float32)          # (th4, W, dp)
        up3 = jnp.broadcast_to(up3[:, None], (th4, 4, W, dp)).reshape(th, W, dp)
        o_ref[0] = o_ref[0] + up3

    return pl.pallas_call(
        head_kernel,
        out_shape=jax.ShapeDtypeStruct((B, H, W, dp), jnp.float32),
        grid=(B, H // th),
        in_specs=[
            pl.BlockSpec((W, W2), lambda b, h: (0, 0)),
            pl.BlockSpec((W, W4), lambda b, h: (0, 0)),
            pl.BlockSpec((1, th, W, dp), lambda b, h: (b, h, 0, 0)),
            pl.BlockSpec((1, th2, W2, dp), lambda b, h: (b, h, 0, 0)),
            pl.BlockSpec((1, th4, W4, dp), lambda b, h: (b, h, 0, 0)),
        ],
        out_specs=pl.BlockSpec((1, th, W, dp), lambda b, h: (b, h, 0, 0)),
        compiler_params=pltpu.CompilerParams(
            dimension_semantics=("parallel", "parallel"),
            vmem_limit_bytes=_VMEM_LIMIT),
    )(u2, u4, g1, g2, g3)


# ----------------------------------------------------------------------------
# Full forward (synthetic backbone + PaDiM head), NCHW in / NCHW out.
# ----------------------------------------------------------------------------
def padim_demo_forward(x_nchw, params, select_index, d_reduced):
    # TODO(synk): pretrained resnet18 / wide_resnet50_2 backbone (+ forward
    # hooks) is replaced by a deterministic synthetic pointwise-conv pyramid
    # with matching layer1/2/3 spatial + channel layout; no checkpoint loaded.
    C1 = params["w1"].shape[1]
    C2 = params["w2"].shape[1]
    C3 = params["w3"].shape[1]
    d = int(d_reduced)
    dp = _round_up(d, LANE)
    C1p, C2p, C3p = (_round_up(c, LANE) for c in (C1, C2, C3))

    # torch.index_select on the concatenated channels, split into per-layer
    # one-hot selection matrices applied inside each conv kernel.
    total = C1 + C2 + C3
    sel = jnp.zeros((total, d), jnp.float32).at[select_index, jnp.arange(d)].set(1.0)
    s1 = jnp.zeros((C1p, dp), jnp.float32).at[:C1, :d].set(sel[:C1]).astype(jnp.bfloat16)
    s2 = jnp.zeros((C2p, dp), jnp.float32).at[:C2, :d].set(sel[C1:C1 + C2]).astype(jnp.bfloat16)
    s3 = jnp.zeros((C3p, dp), jnp.float32).at[:C3, :d].set(sel[C1 + C2:]).astype(jnp.bfloat16)

    # bf16 MXU operands, channels padded to 128 lanes; padded channels stay
    # exactly zero through conv+ReLU and are ignored by the selection matrices.
    w1 = _pad_axis(_pad_axis(params["w1"], 0, LANE), 1, LANE).astype(jnp.bfloat16)
    w2 = _pad_axis(_pad_axis(params["w2"], 0, LANE), 1, LANE).astype(jnp.bfloat16)
    w3 = _pad_axis(_pad_axis(params["w3"], 0, LANE), 1, LANE).astype(jnp.bfloat16)
    b1 = _pad_axis(params["b1"], 0, LANE).astype(jnp.float32)
    b2 = _pad_axis(params["b2"], 0, LANE).astype(jnp.float32)
    b3 = _pad_axis(params["b3"], 0, LANE).astype(jnp.float32)

    x = jnp.transpose(x_nchw, (0, 2, 3, 1))                        # NHWC
    stem = _avg_pool(x, 4)                                         # pool before padding
    stem = _pad_axis(stem, 3, LANE).astype(jnp.bfloat16)
    f1, g1 = pw_conv_relu_sel(stem, w1, b1, s1)                    # layer1 (H/4)
    f2, g2 = pw_conv_relu_sel(_avg_pool(f1, 2), w2, b2, s2)        # layer2 (H/8)
    _, g3 = pw_conv_relu_sel(_avg_pool(f2, 2), w3, b3, s3)         # layer3 (H/16)
    emb = padim_head(g1, g2, g3)                                   # (B,H/4,W/4,dp) f32
    return jnp.transpose(emb[..., :d], (0, 3, 1, 2))               # NCHW


# ----------------------------------------------------------------------------
# Pure-JAX f32 reference of the same forward (for correctness check).
# ----------------------------------------------------------------------------
def reference_forward(x_nchw, params, select_index):
    x = jnp.transpose(x_nchw, (0, 2, 3, 1))
    relu = lambda v: jnp.maximum(v, 0.0)
    stem = _avg_pool(x, 4)
    f1 = relu(jnp.einsum("bhwc,cd->bhwd", stem, params["w1"]) + params["b1"])
    f2 = relu(jnp.einsum("bhwc,cd->bhwd", _avg_pool(f1, 2), params["w2"]) + params["b2"])
    f3 = relu(jnp.einsum("bhwc,cd->bhwd", _avg_pool(f2, 2), params["w3"]) + params["b3"])
    f2u = jnp.repeat(jnp.repeat(f2, 2, axis=1), 2, axis=2)
    f3u = jnp.repeat(jnp.repeat(f3, 4, axis=1), 4, axis=2)
    emb = jnp.concatenate([f1, f2u, f3u], axis=-1)
    emb = jnp.take(emb, select_index, axis=-1)
    return jnp.transpose(emb, (0, 3, 1, 2))


if __name__ == "__main__":
    key = jax.random.PRNGKey(0)
    kx, kp, ks = jax.random.split(key, 3)

    B, CIN, IMG = 2, 3, 32              # small image batch (NCHW, RGB)
    C1, C2, C3 = 16, 32, 64             # layer1/2/3 channels (total_dim = 112)
    D_RED = 32                          # d_reduced

    x = jax.random.normal(kx, (B, CIN, IMG, IMG), dtype=jnp.float32)

    k1, k2, k3 = jax.random.split(kp, 3)
    params = {
        "w1": 0.2 * jax.random.normal(k1, (CIN, C1), jnp.float32),
        "b1": jnp.linspace(-0.1, 0.1, C1, dtype=jnp.float32),
        "w2": 0.2 * jax.random.normal(k2, (C1, C2), jnp.float32),
        "b2": jnp.linspace(-0.1, 0.1, C2, dtype=jnp.float32),
        "w3": 0.2 * jax.random.normal(k3, (C2, C3), jnp.float32),
        "b3": jnp.linspace(-0.1, 0.1, C3, dtype=jnp.float32),
    }
    # deterministic stand-in for the module's `select_index` (random channel subset)
    select_index = jax.random.permutation(ks, C1 + C2 + C3)[:D_RED].astype(jnp.int32)

    out = padim_demo_forward(x, params, select_index, D_RED)
    out = jax.block_until_ready(out)

    ref = reference_forward(x, params, select_index)
    assert out.shape == (B, D_RED, IMG // 4, IMG // 4), out.shape
    # bf16 MXU operands -> tolerance relaxed vs the f32 reference
    assert jnp.allclose(out, ref, atol=2e-2, rtol=2e-2), "mismatch vs reference"

    print("KERNEL_OK")
</pallas_src>

<mosaic_0001>
module attributes {stable_mosaic.version = 11 : i64} {
  func.func @_pw_conv_relu_sel_kernel(%arg0: i32, %arg1: memref<128x128xbf16, #tpu.memory_space<vmem>>, %arg2: memref<128x128xbf16, #tpu.memory_space<vmem>>, %arg3: memref<1x128xf32, #tpu.memory_space<vmem>>, %arg4: memref<128x128xbf16, #tpu.memory_space<vmem>>, %arg5: memref<128x128xbf16, #tpu.memory_space<vmem>>, %arg6: memref<128x128xbf16, #tpu.memory_space<vmem>>) attributes {dimension_semantics = [#tpu.dimension_semantics<parallel>], iteration_bounds = array<i64: 1>, scalar_prefetch = 0 : i64, scratch_operands = 0 : i64, tpu.core_type = #tpu.core_type<tc>, window_params = [{transform_indices = @transform_0, window_bounds = array<i64: 128, 128>}, {pipeline_mode = #tpu.pipeline_mode<synchronous>, transform_indices = @transform_1, window_bounds = array<i64: 128, 128>}, {pipeline_mode = #tpu.pipeline_mode<synchronous>, transform_indices = @transform_2, window_bounds = array<i64: 1, 128>}, {pipeline_mode = #tpu.pipeline_mode<synchronous>, transform_indices = @transform_3, window_bounds = array<i64: 128, 128>}, {transform_indices = @transform_4, window_bounds = array<i64: 128, 128>}, {transform_indices = @transform_5, window_bounds = array<i64: 128, 128>}]} {
    %c0 = arith.constant 0 : index
    %c0_0 = arith.constant 0 : index
    %0 = vector.load %arg1[%c0, %c0_0] : memref<128x128xbf16, #tpu.memory_space<vmem>>, vector<128x128xbf16>
    %c0_1 = arith.constant 0 : index
    %c0_2 = arith.constant 0 : index
    %1 = vector.load %arg2[%c0_1, %c0_2] : memref<128x128xbf16, #tpu.memory_space<vmem>>, vector<128x128xbf16>
    %cst = arith.constant dense<0.000000e+00> : vector<128x128xf32>
    %2 = tpu.matmul %0, %1, %cst {dimension_numbers = #tpu.dot_dimension_numbers<[1], [0], [0], [1], [0, 0, 1, 1], [], []>} : vector<128x128xbf16>, vector<128x128xbf16>, vector<128x128xf32> -> vector<128x128xf32>
    %c0_3 = arith.constant 0 : index
    %c0_4 = arith.constant 0 : index
    %3 = vector.load %arg3[%c0_3, %c0_4] : memref<1x128xf32, #tpu.memory_space<vmem>>, vector<1x128xf32>
    %4 = vector.broadcast %3 : vector<1x128xf32> to vector<128x128xf32>
    %5 = arith.addf %2, %4 : vector<128x128xf32>
    %cst_5 = arith.constant 0.000000e+00 : f32
    %6 = vector.broadcast %cst_5 : f32 to vector<128x128xf32>
    %7 = arith.maximumf %5, %6 : vector<128x128xf32>
    %8 = arith.truncf %7 : vector<128x128xf32> to vector<128x128xbf16>
    %c0_6 = arith.constant 0 : index
    %c0_7 = arith.constant 0 : index
    %9 = vector.load %arg5[%c0_6, %c0_7] : memref<128x128xbf16, #tpu.memory_space<vmem>>, vector<128x128xbf16>
    tpu.vector_store %arg5[%c0_6, %c0_7], %8 {strides = array<i32>} : memref<128x128xbf16, #tpu.memory_space<vmem>>, vector<128x128xbf16>,
    %10 = arith.truncf %7 : vector<128x128xf32> to vector<128x128xbf16>
    %c0_8 = arith.constant 0 : index
    %c0_9 = arith.constant 0 : index
    %11 = vector.load %arg4[%c0_8, %c0_9] : memref<128x128xbf16, #tpu.memory_space<vmem>>, vector<128x128xbf16>
    %cst_10 = arith.constant dense<0.000000e+00> : vector<128x128xf32>
    %12 = tpu.matmul %10, %11, %cst_10 {dimension_numbers = #tpu.dot_dimension_numbers<[1], [0], [0], [1], [0, 0, 1, 1], [], []>} : vector<128x128xbf16>, vector<128x128xbf16>, vector<128x128xf32> -> vector<128x128xf32>
    %13 = arith.truncf %12 : vector<128x128xf32> to vector<128x128xbf16>
    %c0_11 = arith.constant 0 : index
    %c0_12 = arith.constant 0 : index
    %14 = vector.load %arg6[%c0_11, %c0_12] : memref<128x128xbf16, #tpu.memory_space<vmem>>, vector<128x128xbf16>
    tpu.vector_store %arg6[%c0_11, %c0_12], %13 {strides = array<i32>} : memref<128x128xbf16, #tpu.memory_space<vmem>>, vector<128x128xbf16>,
    return
  }
  func.func @transform_0(%arg0: i32) -> (i32, i32) {
    %c0_i32 = arith.constant 0 : i32
    %c0_i32_0 = arith.constant 0 : i32
    return %arg0, %c0_i32 : i32, i32
  }
  func.func @transform_1(%arg0: i32) -> (i32, i32) {
    %c0_i32 = arith.constant 0 : i32
    %c0_i32_0 = arith.constant 0 : i32
    %c0_i32_1 = arith.constant 0 : i32
    return %c0_i32, %c0_i32_0 : i32, i32
  }
  func.func @transform_2(%arg0: i32) -> (i32, i32) {
    %c0_i32 = arith.constant 0 : i32
    %c0_i32_0 = arith.constant 0 : i32
    %c0_i32_1 = arith.constant 0 : i32
    return %c0_i32, %c0_i32_0 : i32, i32
  }
  func.func @transform_3(%arg0: i32) -> (i32, i32) {
    %c0_i32 = arith.constant 0 : i32
    %c0_i32_0 = arith.constant 0 : i32
    %c0_i32_1 = arith.constant 0 : i32
    return %c0_i32, %c0_i32_0 : i32, i32
  }
  func.func @transform_4(%arg0: i32) -> (i32, i32) {
    %c0_i32 = arith.constant 0 : i32
    %c0_i32_0 = arith.constant 0 : i32
    return %arg0, %c0_i32 : i32, i32
  }
  func.func @transform_5(%arg0: i32) -> (i32, i32) {
    %c0_i32 = arith.constant 0 : i32
    %c0_i32_0 = arith.constant 0 : i32
    return %arg0, %c0_i32 : i32, i32
  }
}

</mosaic_0001>

<llo_original>
// kernel: tpu_custom_call.1
$region0: #{tpu_custom_call.1}
  #allocation0 [shape = 'u32[]', space=smem, size = 0x4, offset = 0x4, fixed_abs, tag = 'smem constant byte address 0x4 - core index']
  #allocation1 [shape = 'u32[144,128]{1,0:T(1,128)}', space=vmem, size = 0x12000, scoped, tag = 'internal scratch']
  %s0 = inlined_call_operand.hbm [shape: bf16[128,128], index: 0, kind: input, shape index: {}]
  %s1 = inlined_call_operand.hbm [shape: bf16[128,128], index: 1, kind: input, shape index: {}]
  %s2 = inlined_call_operand.vmem [shape: f32[1,128], index: 2, kind: input, shape index: {}]
  %s3 = inlined_call_operand.hbm [shape: bf16[128,128], index: 3, kind: input, shape index: {}]
  %s4 = inlined_call_operand.hbm [shape: bf16[128,128], index: 4, kind: output, shape index: {0}]
  %s5 = inlined_call_operand.hbm [shape: bf16[128,128], index: 5, kind: output, shape index: {1}]
  %6 = xla_tuple %s4, %s5
  %s7 = sld [smem:[#allocation0]]
  $region46: #{tpu_custom_call.1} parent=0
    _
  %s9 = ssub.s32 1, %s7
  %s10 = scalar_select 0, %s9, %s7
  $region1: #{tpu_custom_call.1} parent=0
    #allocation2 [shape = 'u8[32768]{0}', space=vmem, size = 0x8000, scoped, tag = 'input window, operand 0, single buffered']
    #allocation3 [shape = 's32[1]{0}', space=sflag, size = 0x4, scoped, tag = 'scoped memory for tpu_custom_call.1']
    #allocation4 [shape = 's32[1]{0}', space=sflag, size = 0x4, scoped, tag = 'scoped memory for tpu_custom_call.1']
    #allocation5 [shape = 'u8[32768]{0}', space=vmem, size = 0x8000, scoped, tag = 'input window, operand 1, single buffered']
    #allocation6 [shape = 's32[1]{0}', space=sflag, size = 0x4, scoped, tag = 'scoped memory for tpu_custom_call.1']
    #allocation7 [shape = 'u8[32768]{0}', space=vmem, size = 0x8000, scoped, tag = 'input window, operand 3, single buffered']
    #allocation8 [shape = 'u8[32768]{0}', space=vmem, size = 0x8000, scoped, tag = 'output window, operand 0, single buffered']
    #allocation9 [shape = 'u8[32768]{0}', space=vmem, size = 0x8000, scoped, tag = 'output window, operand 1, single buffered']
    #allocation10 [shape = 's32[1]{0}', space=sflag, size = 0x4, scoped, tag = 'scoped memory for tpu_custom_call.1']
    %11 = vsyncpa [#allocation3], 0
    %12 = vsyncpa [#allocation6], 0
    %13 = vsyncpa [#allocation4], 0
    %14 = vsyncpa [#allocation10], 0
    // Predicated region
    $region2: #{tpu_custom_call.1} parent=1 // pred_check
      _
    $region3: #{tpu_custom_call.1} parent=1 // pred_check_branch
      %16 = sbr.rel (0) target = $region5
    $region4: #{tpu_custom_call.1} parent=1 // pred_region
      %s18 = ssub.s32 1024, 1024
      %19 = vsyncadd [#allocation3], %s18
      %s20 = sshll.u32 [#allocation2], 4
      %s21 = int_to_ptr.vmem [resolvable:$true] %s20
      %26 = dma.hbm_to_vmem [thread:$0]  %s0, 1024, %s21, [#allocation3], 64, 64, 4
    $region5: #{tpu_custom_call.1} parent=1 // pred_fallthru
      _
    // Predicated region
    $region6: #{tpu_custom_call.1} parent=1 // pred_check
      _
    $region7: #{tpu_custom_call.1} parent=1 // pred_check_branch
      %28 = sbr.rel (0) target = $region9
    $region8: #{tpu_custom_call.1} parent=1 // pred_region
      %s30 = ssub.s32 1024, 1024
      %31 = vsyncadd [#allocation6], %s30
      %s32 = sshll.u32 [#allocation5], 4
      %s33 = int_to_ptr.vmem [resolvable:$true] %s32
      %38 = dma.hbm_to_vmem [thread:$0]  %s1, 1024, %s33, [#allocation6], 64, 64, 4
    $region9: #{tpu_custom_call.1} parent=1 // pred_fallthru
      _
    // Predicated region
    $region10: #{tpu_custom_call.1} parent=1 // pred_check
      _
    $region11: #{tpu_custom_call.1} parent=1 // pred_check_branch
      %40 = sbr.rel (0) target = $region13
    $region12: #{tpu_custom_call.1} parent=1 // pred_region
      _
    $region13: #{tpu_custom_call.1} parent=1 // pred_fallthru
      _
    // Predicated region
    $region14: #{tpu_custom_call.1} parent=1 // pred_check
      _
    $region15: #{tpu_custom_call.1} parent=1 // pred_check_branch
      %42 = sbr.rel (0) target = $region17
    $region16: #{tpu_custom_call.1} parent=1 // pred_region
      %s44 = ssub.s32 1024, 1024
      %45 = vsyncadd [#allocation6], %s44
      %s46 = sshll.u32 [#allocation7], 4
      %s47 = int_to_ptr.vmem [resolvable:$true] %s46
      %52 = dma.hbm_to_vmem [thread:$0]  %s3, 1024, %s47, [#allocation6], 64, 64, 4
    $region17: #{tpu_custom_call.1} parent=1 // pred_fallthru
      _
    // Predicated region
    $region18: #{tpu_custom_call.1} parent=1 // pred_check
      _
    $region19: #{tpu_custom_call.1} parent=1 // pred_check_branch
      %54 = sbr.rel (0) target = $region21
    $region20: #{tpu_custom_call.1} parent=1 // pred_region
      %55 = dma.done [#allocation3], 1024
    $region21: #{tpu_custom_call.1} parent=1 // pred_fallthru
      _
    // Predicated region
    $region22: #{tpu_custom_call.1} parent=1 // pred_check
      _
    $region23: #{tpu_custom_call.1} parent=1 // pred_check_branch
      %57 = sbr.rel (0) target = $region25
    $region24: #{tpu_custom_call.1} parent=1 // pred_region
      %58 = dma.done [#allocation6], 1024
    $region25: #{tpu_custom_call.1} parent=1 // pred_fallthru
      _
    // Predicated region
    $region26: #{tpu_custom_call.1} parent=1 // pred_check
      _
    $region27: #{tpu_custom_call.1} parent=1 // pred_check_branch
      %60 = sbr.rel (0) target = $region29
    $region28: #{tpu_custom_call.1} parent=1 // pred_region
      %61 = dma.done [#allocation6], 1024
    $region29: #{tpu_custom_call.1} parent=1 // pred_fallthru
      _
    %v63 = vld [vmem:[#allocation2] sm:$0xf]
    %v64 = vld [vmem:[#allocation2 + $0x4] sm:$0xf]
    %v65 = vld [vmem:[#allocation2 + $0x8] sm:$0xf]
    %v66 = vld [vmem:[#allocation2 + $0xc] sm:$0xf]
    %v67 = vld [vmem:[#allocation2 + $0x10] sm:$0xf]
    %v68 = vld [vmem:[#allocation2 + $0x14] sm:$0xf]
    %v69 = vld [vmem:[#allocation2 + $0x18] sm:$0xf]
    %v70 = vld [vmem:[#allocation2 + $0x1c] sm:$0xf]
    %v71 = vld [vmem:[#allocation2 + $0x20] sm:$0xf]
    %v72 = vld [vmem:[#allocation2 + $0x24] sm:$0xf]
    %v73 = vld [vmem:[#allocation2 + $0x28] sm:$0xf]
    %v74 = vld [vmem:[#allocation2 + $0x2c] sm:$0xf]
    %v75 = vld [vmem:[#allocation2 + $0x30] sm:$0xf]
    %v76 = vld [vmem:[#allocation2 + $0x34] sm:$0xf]
    %v77 = vld [vmem:[#allocation2 + $0x38] sm:$0xf]
    %v78 = vld [vmem:[#allocation2 + $0x3c] sm:$0xf]
    %v79 = vld [vmem:[#allocation5] sm:$0xf]
    %v80 = vld [vmem:[#allocation5 + $0x4] sm:$0xf]
    %v81 = vld [vmem:[#allocation5 + $0x8] sm:$0xf]
    %v82 = vld [vmem:[#allocation5 + $0xc] sm:$0xf]
    %v83 = vld [vmem:[#allocation5 + $0x10] sm:$0xf]
    %v84 = vld [vmem:[#allocation5 + $0x14] sm:$0xf]
    %v85 = vld [vmem:[#allocation5 + $0x18] sm:$0xf]
    %v86 = vld [vmem:[#allocation5 + $0x1c] sm:$0xf]
    %v87 = vld [vmem:[#allocation5 + $0x20] sm:$0xf]
    %v88 = vld [vmem:[#allocation5 + $0x24] sm:$0xf]
    %v89 = vld [vmem:[#allocation5 + $0x28] sm:$0xf]
    %v90 = vld [vmem:[#allocation5 + $0x2c] sm:$0xf]
    %v91 = vld [vmem:[#allocation5 + $0x30] sm:$0xf]
    %v92 = vld [vmem:[#allocation5 + $0x34] sm:$0xf]
    %v93 = vld [vmem:[#allocation5 + $0x38] sm:$0xf]
    %v94 = vld [vmem:[#allocation5 + $0x3c] sm:$0xf]
    %v95 = vld [vmem:[%s2] sm:$0x1]
    %v97 = vlaneseq
    %v98 = vshrl.u32 %v97, 7
    %v99 = vsub.s32 0, %v98
    %v100 = vrot.slane %v95, %v99
    %v118 = vunpack.c.l.b16 %v63
    %v119 = vunpack.c.l.b16 %v64
    %v120 = vunpack.c.l.b16 %v65
    %v121 = vunpack.c.l.b16 %v66
    %v122 = vunpack.c.l.b16 %v67
    %v123 = vunpack.c.l.b16 %v68
    %v124 = vunpack.c.l.b16 %v69
    %v125 = vunpack.c.l.b16 %v70
    %v126 = vunpack.c.l.b16 %v71
    %v127 = vunpack.c.l.b16 %v72
    %v128 = vunpack.c.l.b16 %v73
    %v129 = vunpack.c.l.b16 %v74
    %v130 = vunpack.c.l.b16 %v75
    %v131 = vunpack.c.l.b16 %v76
    %v132 = vunpack.c.l.b16 %v77
    %v133 = vunpack.c.l.b16 %v78
    %v134 = vpack.c.b16 %v119, %v118
    %v135 = vpack.c.b16 %v121, %v120
    %v136 = vpack.c.b16 %v123, %v122
    %v137 = vpack.c.b16 %v125, %v124
    %v138 = vpack.c.b16 %v127, %v126
    %v139 = vpack.c.b16 %v129, %v128
    %v140 = vpack.c.b16 %v131, %v130
    %v141 = vpack.c.b16 %v133, %v132
    %v166 = vunpack.c.l.b16 %v79
    %v167 = vunpack.c.l.b16 %v80
    %v168 = vunpack.c.l.b16 %v81
    %v169 = vunpack.c.l.b16 %v82
    %v170 = vunpack.c.l.b16 %v83
    %v171 = vunpack.c.l.b16 %v84
    %v172 = vunpack.c.l.b16 %v85
    %v173 = vunpack.c.l.b16 %v86
    %v174 = vunpack.c.l.b16 %v87
    %v175 = vunpack.c.l.b16 %v88
    %v176 = vunpack.c.l.b16 %v89
    %v177 = vunpack.c.l.b16 %v90
    %v178 = vunpack.c.l.b16 %v91
    %v179 = vunpack.c.l.b16 %v92
    %v180 = vunpack.c.l.b16 %v93
    %v181 = vunpack.c.l.b16 %v94
    %v182 = vpack.c.b16 %v167, %v166
    %v183 = vpack.c.b16 %v169, %v168
    %v184 = vpack.c.b16 %v171, %v170
    %v185 = vpack.c.b16 %v173, %v172
    %v186 = vpack.c.b16 %v175, %v174
    %v187 = vpack.c.b16 %v177, %v176
    %v188 = vpack.c.b16 %v179, %v178
    %v189 = vpack.c.b16 %v181, %v180
    %198 = vmatprep.subr.bf16.mxu0 0
    %199 = vmatpush1.bf16.msra.mxu0 %v182
    %200 = vmatprep.subr.bf16.mxu0 0
    %201 = vmatpush1.bf16.msra.mxu0 %v183
    %202 = vmatprep.subr.bf16.mxu0 0
    %203 = vmatpush1.bf16.msra.mxu0 %v184
    %204 = vmatprep.subr.bf16.mxu0 0
    %205 = vmatpush1.bf16.msra.mxu0 %v185
    %206 = vmatprep.subr.bf16.mxu0 0
    %207 = vmatpush1.bf16.msra.mxu0 %v186
    %208 = vmatprep.subr.bf16.mxu0 0
    %209 = vmatpush1.bf16.msra.mxu0 %v187
    %210 = vmatprep.subr.bf16.mxu0 0
    %211 = vmatpush1.bf16.msra.mxu0 %v188
    %212 = vmatprep.subr.bf16.mxu0 0
    %213 = vmatpush1.bf16.msra.mxu0 %v189
    %214 = vmatprep.subr.bf16.mxu0 0
    %215 = vmatpush1.bf16.msra.mxu0 0
    %216 = vmatprep.subr.bf16.mxu0 0
    %217 = vmatpush1.bf16.msra.mxu0 0
    %218 = vmatprep.subr.bf16.mxu0 0
    %219 = vmatpush1.bf16.msra.mxu0 0
    %220 = vmatprep.subr.bf16.mxu0 0
    %221 = vmatpush1.bf16.msra.mxu0 0
    %222 = vmatprep.subr.bf16.mxu0 0
    %223 = vmatpush1.bf16.msra.mxu0 0
    %224 = vmatprep.subr.bf16.mxu0 0
    %225 = vmatpush1.bf16.msra.mxu0 0
    %226 = vmatprep.subr.bf16.mxu0 0
    %227 = vmatpush1.bf16.msra.mxu0 0
    %228 = vmatprep.subr.bf16.mxu0 0
    %229 = vmatpush1.bf16.msra.mxu0 0
    %230 = vmatprep.mubr.bf16.mxu0 0
    %231 = vmatmul.mubr.bf16.gmra.mrb[0].mxu0 %v134
    %v232 = vpop.f32.mrb[0].mxu0
    %v233 = vadd.f32 %v100, %v232
    %v234 = vpop.f32.mrb[0].mxu0
    %v235 = vpop.f32.mrb[0].mxu0
    %v236 = vadd.f32 %v100, %v235
    %v237 = vpop.f32.mrb[0].mxu0
    %238 = vmatprep.mubr.bf16.mxu0 0
    %239 = vmatmul.mubr.bf16.gmra.mrb[0].mxu0 %v135
    %v240 = vpop.f32.mrb[0].mxu0
    %v241 = vadd.f32 %v100, %v240
    %v242 = vpop.f32.mrb[0].mxu0
    %v243 = vpop.f32.mrb[0].mxu0
    %v244 = vadd.f32 %v100, %v243
    %v245 = vpop.f32.mrb[0].mxu0
    %246 = vmatprep.mubr.bf16.mxu0 0
    %247 = vmatmul.mubr.bf16.gmra.mrb[0].mxu0 %v136
    %v248 = vpop.f32.mrb[0].mxu0
    %v249 = vadd.f32 %v100, %v248
    %v250 = vpop.f32.mrb[0].mxu0
    %v251 = vpop.f32.mrb[0].mxu0
    %v252 = vadd.f32 %v100, %v251
    %v253 = vpop.f32.mrb[0].mxu0
    %254 = vmatprep.mubr.bf16.mxu0 0
    %255 = vmatmul.mubr.bf16.gmra.mrb[0].mxu0 %v137
    %v256 = vpop.f32.mrb[0].mxu0
    %v257 = vadd.f32 %v100, %v256
    %v258 = vpop.f32.mrb[0].mxu0
    %v259 = vpop.f32.mrb[0].mxu0
    %v260 = vadd.f32 %v100, %v259
    %v261 = vpop.f32.mrb[0].mxu0
    %262 = vmatprep.mubr.bf16.mxu0 0
    %263 = vmatmul.mubr.bf16.gmra.mrb[0].mxu0 %v138
    %v264 = vpop.f32.mrb[0].mxu0
    %v265 = vadd.f32 %v100, %v264
    %v266 = vpop.f32.mrb[0].mxu0
    %v267 = vpop.f32.mrb[0].mxu0
    %v268 = vadd.f32 %v100, %v267
    %v269 = vpop.f32.mrb[0].mxu0
    %270 = vmatprep.mubr.bf16.mxu0 0
    %271 = vmatmul.mubr.bf16.gmra.mrb[0].mxu0 %v139
    %v272 = vpop.f32.mrb[0].mxu0
    %v273 = vadd.f32 %v100, %v272
    %v274 = vpop.f32.mrb[0].mxu0
    %v275 = vpop.f32.mrb[0].mxu0
    %v276 = vadd.f32 %v100, %v275
    %v277 = vpop.f32.mrb[0].mxu0
    %278 = vmatprep.mubr.bf16.mxu0 0
    %279 = vmatmul.mubr.bf16.gmra.mrb[0].mxu0 %v140
    %v280 = vpop.f32.mrb[0].mxu0
    %v281 = vadd.f32 %v100, %v280
    %v282 = vpop.f32.mrb[0].mxu0
    %v283 = vpop.f32.mrb[0].mxu0
    %v284 = vadd.f32 %v100, %v283
    %v285 = vpop.f32.mrb[0].mxu0
    %286 = vmatprep.mubr.bf16.mxu0 0
    %287 = vmatmul.mubr.bf16.gmra.mrb[0].mxu0 %v141
    %v288 = vpop.f32.mrb[0].mxu0
    %v289 = vadd.f32 %v100, %v288
    %v290 = vpop.f32.mrb[0].mxu0
    %v291 = vpop.f32.mrb[0].mxu0
    %v292 = vadd.f32 %v100, %v291
    %v293 = vpop.f32.mrb[0].mxu0
    %294 = vdwg.mxu0
    %v295 = vmax.f32 %v233, 0.0
    %v296 = vmax.f32 %v236, 0.0
    %v297 = vmax.f32 %v241, 0.0
    %v298 = vmax.f32 %v244, 0.0
    %v299 = vmax.f32 %v249, 0.0
    %v300 = vmax.f32 %v252, 0.0
    %v301 = vmax.f32 %v257, 0.0
    %v302 = vmax.f32 %v260, 0.0
    %v303 = vmax.f32 %v265, 0.0
    %v304 = vmax.f32 %v268, 0.0
    %v305 = vmax.f32 %v273, 0.0
    %v306 = vmax.f32 %v276, 0.0
    %v307 = vmax.f32 %v281, 0.0
    %v308 = vmax.f32 %v284, 0.0
    %v309 = vmax.f32 %v289, 0.0
    %v310 = vmax.f32 %v292, 0.0
    %v311 = vpack.c.bf16 %v296, %v295
    %v312 = vpack.c.bf16 %v298, %v297
    %v313 = vpack.c.bf16 %v300, %v299
    %v314 = vpack.c.bf16 %v302, %v301
    %v315 = vpack.c.bf16 %v304, %v303
    %v316 = vpack.c.bf16 %v306, %v305
    %v317 = vpack.c.bf16 %v308, %v307
    %v318 = vpack.c.bf16 %v310, %v309
    %v327 = vunpack.c.l.b16 %v311
    %v328 = vunpack.c.h.b16 %v311
    %v329 = vunpack.c.l.b16 %v312
    %v330 = vunpack.c.h.b16 %v312
    %v331 = vunpack.c.l.b16 %v313
    %v332 = vunpack.c.h.b16 %v313
    %v333 = vunpack.c.l.b16 %v314
    %v334 = vunpack.c.h.b16 %v314
    %v335 = vunpack.c.l.b16 %v315
    %v336 = vunpack.c.h.b16 %v315
    %v337 = vunpack.c.l.b16 %v316
    %v338 = vunpack.c.h.b16 %v316
    %v339 = vunpack.c.l.b16 %v317
    %v340 = vunpack.c.h.b16 %v317
    %v341 = vunpack.c.l.b16 %v318
    %v342 = vunpack.c.h.b16 %v318
    %v343 = vpack.c.b16 %v327, %v327
    %v344 = vpack.c.b16 %v328, %v328
    %v345 = vpack.c.b16 %v329, %v329
    %v346 = vpack.c.b16 %v330, %v330
    %v347 = vpack.c.b16 %v331, %v331
    %v348 = vpack.c.b16 %v332, %v332
    %v349 = vpack.c.b16 %v333, %v333
    %v350 = vpack.c.b16 %v334, %v334
    %v351 = vpack.c.b16 %v335, %v335
    %v352 = vpack.c.b16 %v336, %v336
    %v353 = vpack.c.b16 %v337, %v337
    %v354 = vpack.c.b16 %v338, %v338
    %v355 = vpack.c.b16 %v339, %v339
    %v356 = vpack.c.b16 %v340, %v340
    %v357 = vpack.c.b16 %v341, %v341
    %v358 = vpack.c.b16 %v342, %v342
    %375 = vst [vmem:[#allocation8] sm:$0xf] %v343
    %376 = vst [vmem:[#allocation8 + $0x4] sm:$0xf] %v344
    %377 = vst [vmem:[#allocation8 + $0x8] sm:$0xf] %v345
    %378 = vst [vmem:[#allocation8 + $0xc] sm:$0xf] %v346
    %379 = vst [vmem:[#allocation8 + $0x10] sm:$0xf] %v347
    %380 = vst [vmem:[#allocation8 + $0x14] sm:$0xf] %v348
    %381 = vst [vmem:[#allocation8 + $0x18] sm:$0xf] %v349
    %382 = vst [vmem:[#allocation8 + $0x1c] sm:$0xf] %v350
    %383 = vst [vmem:[#allocation8 + $0x20] sm:$0xf] %v351
    %384 = vst [vmem:[#allocation8 + $0x24] sm:$0xf] %v352
    %385 = vst [vmem:[#allocation8 + $0x28] sm:$0xf] %v353
    %386 = vst [vmem:[#allocation8 + $0x2c] sm:$0xf] %v354
    %387 = vst [vmem:[#allocation8 + $0x30] sm:$0xf] %v355
    %388 = vst [vmem:[#allocation8 + $0x34] sm:$0xf] %v356
    %389 = vst [vmem:[#allocation8 + $0x38] sm:$0xf] %v357
    %390 = vst [vmem:[#allocation8 + $0x3c] sm:$0xf] %v358
    %v391 = vld [vmem:[#allocation7] sm:$0xf]
    %v392 = vld [vmem:[#allocation7 + $0x4] sm:$0xf]
    %v393 = vld [vmem:[#allocation7 + $0x8] sm:$0xf]
    %v394 = vld [vmem:[#allocation7 + $0xc] sm:$0xf]
    %v395 = vld [vmem:[#allocation7 + $0x10] sm:$0xf]
    %v396 = vld [vmem:[#allocation7 + $0x14] sm:$0xf]
    %v397 = vld [vmem:[#allocation7 + $0x18] sm:$0xf]
    %v398 = vld [vmem:[#allocation7 + $0x1c] sm:$0xf]
    %v399 = vld [vmem:[#allocation7 + $0x20] sm:$0xf]
    %v400 = vld [vmem:[#allocation7 + $0x24] sm:$0xf]
    %v401 = vld [vmem:[#allocation7 + $0x28] sm:$0xf]
    %v402 = vld [vmem:[#allocation7 + $0x2c] sm:$0xf]
    %v403 = vld [vmem:[#allocation7 + $0x30] sm:$0xf]
    %v404 = vld [vmem:[#allocation7 + $0x34] sm:$0xf]
    %v405 = vld [vmem:[#allocation7 + $0x38] sm:$0xf]
    %v406 = vld [vmem:[#allocation7 + $0x3c] sm:$0xf]
    %v423 = vunpack.c.l.b16 %v391
    %v424 = vunpack.c.l.b16 %v392
    %v425 = vunpack.c.l.b16 %v393
    %v426 = vunpack.c.l.b16 %v394
    %v427 = vunpack.c.l.b16 %v395
    %v428 = vunpack.c.l.b16 %v396
    %v429 = vunpack.c.l.b16 %v397
    %v430 = vunpack.c.l.b16 %v398
    %v431 = vunpack.c.l.b16 %v399
    %v432 = vunpack.c.l.b16 %v400
    %v433 = vunpack.c.l.b16 %v401
    %v434 = vunpack.c.l.b16 %v402
    %v435 = vunpack.c.l.b16 %v403
    %v436 = vunpack.c.l.b16 %v404
    %v437 = vunpack.c.l.b16 %v405
    %v438 = vunpack.c.l.b16 %v406
    %v439 = vpack.c.b16 %v424, %v423
    %v440 = vpack.c.b16 %v426, %v425
    %v441 = vpack.c.b16 %v428, %v427
    %v442 = vpack.c.b16 %v430, %v429
    %v443 = vpack.c.b16 %v432, %v431
    %v444 = vpack.c.b16 %v434, %v433
    %v445 = vpack.c.b16 %v436, %v435
    %v446 = vpack.c.b16 %v438, %v437
    %455 = vmatprep.subr.bf16.mxu0 0
    %456 = vmatpush1.bf16.msra.mxu0 %v439
    %457 = vmatprep.subr.bf16.mxu0 0
    %458 = vmatpush1.bf16.msra.mxu0 %v440
    %459 = vmatprep.subr.bf16.mxu0 0
    %460 = vmatpush1.bf16.msra.mxu0 %v441
    %461 = vmatprep.subr.bf16.mxu0 0
    %462 = vmatpush1.bf16.msra.mxu0 %v442
    %463 = vmatprep.subr.bf16.mxu0 0
    %464 = vmatpush1.bf16.msra.mxu0 %v443
    %465 = vmatprep.subr.bf16.mxu0 0
    %466 = vmatpush1.bf16.msra.mxu0 %v444
    %467 = vmatprep.subr.bf16.mxu0 0
    %468 = vmatpush1.bf16.msra.mxu0 %v445
    %469 = vmatprep.subr.bf16.mxu0 0
    %470 = vmatpush1.bf16.msra.mxu0 %v446
    %471 = vmatprep.subr.bf16.mxu0 0
    %472 = vmatpush1.bf16.msra.mxu0 0
    %473 = vmatprep.subr.bf16.mxu0 0
    %474 = vmatpush1.bf16.msra.mxu0 0
    %475 = vmatprep.subr.bf16.mxu0 0
    %476 = vmatpush1.bf16.msra.mxu0 0
    %477 = vmatprep.subr.bf16.mxu0 0
    %478 = vmatpush1.bf16.msra.mxu0 0
    %479 = vmatprep.subr.bf16.mxu0 0
    %480 = vmatpush1.bf16.msra.mxu0 0
    %481 = vmatprep.subr.bf16.mxu0 0
    %482 = vmatpush1.bf16.msra.mxu0 0
    %483 = vmatprep.subr.bf16.mxu0 0
    %484 = vmatpush1.bf16.msra.mxu0 0
    %485 = vmatprep.subr.bf16.mxu0 0
    %486 = vmatpush1.bf16.msra.mxu0 0
    %487 = vmatprep.mubr.bf16.mxu0 0
    %488 = vmatmul.mubr.bf16.gmra.mrb[0].mxu0 %v311
    %v489 = vpop.f32.mrb[0].mxu0
    %v490 = vadd.f32 0.0, %v489
    %v491 = vpop.f32.mrb[0].mxu0
    %v492 = vpop.f32.mrb[0].mxu0
    %v493 = vadd.f32 0.0, %v492
    %v494 = vpop.f32.mrb[0].mxu0
    %495 = vmatprep.mubr.bf16.mxu0 0
    %496 = vmatmul.mubr.bf16.gmra.mrb[0].mxu0 %v312
    %v497 = vpop.f32.mrb[0].mxu0
    %v498 = vadd.f32 0.0, %v497
    %v499 = vpop.f32.mrb[0].mxu0
    %v500 = vpop.f32.mrb[0].mxu0
    %v501 = vadd.f32 0.0, %v500
    %v502 = vpop.f32.mrb[0].mxu0
    %503 = vmatprep.mubr.bf16.mxu0 0
    %504 = vmatmul.mubr.bf16.gmra.mrb[0].mxu0 %v313
    %v505 = vpop.f32.mrb[0].mxu0
    %v506 = vadd.f32 0.0, %v505
    %v507 = vpop.f32.mrb[0].mxu0
    %v508 = vpop.f32.mrb[0].mxu0
    %v509 = vadd.f32 0.0, %v508
    %v510 = vpop.f32.mrb[0].mxu0
    %511 = vmatprep.mubr.bf16.mxu0 0
    %512 = vmatmul.mubr.bf16.gmra.mrb[0].mxu0 %v314
    %v513 = vpop.f32.mrb[0].mxu0
    %v514 = vadd.f32 0.0, %v513
    %v515 = vpop.f32.mrb[0].mxu0
    %v516 = vpop.f32.mrb[0].mxu0
    %v517 = vadd.f32 0.0, %v516
    %v518 = vpop.f32.mrb[0].mxu0
    %519 = vmatprep.mubr.bf16.mxu0 0
    %520 = vmatmul.mubr.bf16.gmra.mrb[0].mxu0 %v315
    %v521 = vpop.f32.mrb[0].mxu0
    %v522 = vadd.f32 0.0, %v521
    %v523 = vpop.f32.mrb[0].mxu0
    %v524 = vpop.f32.mrb[0].mxu0
    %v525 = vadd.f32 0.0, %v524
    %v526 = vpop.f32.mrb[0].mxu0
    %527 = vmatprep.mubr.bf16.mxu0 0
    %528 = vmatmul.mubr.bf16.gmra.mrb[0].mxu0 %v316
    %v529 = vpop.f32.mrb[0].mxu0
    %v530 = vadd.f32 0.0, %v529
    %v531 = vpop.f32.mrb[0].mxu0
    %v532 = vpop.f32.mrb[0].mxu0
    %v533 = vadd.f32 0.0, %v532
    %v534 = vpop.f32.mrb[0].mxu0
    %535 = vmatprep.mubr.bf16.mxu0 0
    %536 = vmatmul.mubr.bf16.gmra.mrb[0].mxu0 %v317
    %v537 = vpop.f32.mrb[0].mxu0
    %v538 = vadd.f32 0.0, %v537
    %v539 = vpop.f32.mrb[0].mxu0
    %v540 = vpop.f32.mrb[0].mxu0
    %v541 = vadd.f32 0.0, %v540
    %v542 = vpop.f32.mrb[0].mxu0
    %543 = vmatprep.mubr.bf16.mxu0 0
    %544 = vmatmul.mubr.bf16.gmra.mrb[0].mxu0 %v318
    %v545 = vpop.f32.mrb[0].mxu0
    %v546 = vadd.f32 0.0, %v545
    %v547 = vpop.f32.mrb[0].mxu0
    %v548 = vpop.f32.mrb[0].mxu0
    %v549 = vadd.f32 0.0, %v548
    %v550 = vpop.f32.mrb[0].mxu0
    %551 = vdwg.mxu0
    %v552 = vpack.c.bf16 %v493, %v490
    %v553 = vpack.c.bf16 %v501, %v498
    %v554 = vpack.c.bf16 %v509, %v506
    %v555 = vpack.c.bf16 %v517, %v514
    %v556 = vpack.c.bf16 %v525, %v522
    %v557 = vpack.c.bf16 %v533, %v530
    %v558 = vpack.c.bf16 %v541, %v538
    %v559 = vpack.c.bf16 %v549, %v546
    %v568 = vunpack.c.l.b16 %v552
    %v569 = vunpack.c.h.b16 %v552
    %v570 = vunpack.c.l.b16 %v553
    %v571 = vunpack.c.h.b16 %v553
    %v572 = vunpack.c.l.b16 %v554
    %v573 = vunpack.c.h.b16 %v554
    %v574 = vunpack.c.l.b16 %v555
    %v575 = vunpack.c.h.b16 %v555
    %v576 = vunpack.c.l.b16 %v556
    %v577 = vunpack.c.h.b16 %v556
    %v578 = vunpack.c.l.b16 %v557
    %v579 = vunpack.c.h.b16 %v557
    %v580 = vunpack.c.l.b16 %v558
    %v581 = vunpack.c.h.b16 %v558
    %v582 = vunpack.c.l.b16 %v559
    %v583 = vunpack.c.h.b16 %v559
    %v584 = vpack.c.b16 %v568, %v568
    %v585 = vpack.c.b16 %v569, %v569
    %v586 = vpack.c.b16 %v570, %v570
    %v587 = vpack.c.b16 %v571, %v571
    %v588 = vpack.c.b16 %v572, %v572
    %v589 = vpack.c.b16 %v573, %v573
    %v590 = vpack.c.b16 %v574, %v574
    %v591 = vpack.c.b16 %v575, %v575
    %v592 = vpack.c.b16 %v576, %v576
    %v593 = vpack.c.b16 %v577, %v577
    %v594 = vpack.c.b16 %v578, %v578
    %v595 = vpack.c.b16 %v579, %v579
    %v596 = vpack.c.b16 %v580, %v580
    %v597 = vpack.c.b16 %v581, %v581
    %v598 = vpack.c.b16 %v582, %v582
    %v599 = vpack.c.b16 %v583, %v583
    %616 = vst [vmem:[#allocation9] sm:$0xf] %v584
    %617 = vst [vmem:[#allocation9 + $0x4] sm:$0xf] %v585
    %618 = vst [vmem:[#allocation9 + $0x8] sm:$0xf] %v586
    %619 = vst [vmem:[#allocation9 + $0xc] sm:$0xf] %v587
    %620 = vst [vmem:[#allocation9 + $0x10] sm:$0xf] %v588
    %621 = vst [vmem:[#allocation9 + $0x14] sm:$0xf] %v589
    %622 = vst [vmem:[#allocation9 + $0x18] sm:$0xf] %v590
    %623 = vst [vmem:[#allocation9 + $0x1c] sm:$0xf] %v591
    %624 = vst [vmem:[#allocation9 + $0x20] sm:$0xf] %v592
    %625 = vst [vmem:[#allocation9 + $0x24] sm:$0xf] %v593
    %626 = vst [vmem:[#allocation9 + $0x28] sm:$0xf] %v594
    %627 = vst [vmem:[#allocation9 + $0x2c] sm:$0xf] %v595
    %628 = vst [vmem:[#allocation9 + $0x30] sm:$0xf] %v596
    %629 = vst [vmem:[#allocation9 + $0x34] sm:$0xf] %v597
    %630 = vst [vmem:[#allocation9 + $0x38] sm:$0xf] %v598
    %631 = vst [vmem:[#allocation9 + $0x3c] sm:$0xf] %v599
    // Predicated region
    $region30: #{tpu_custom_call.1} parent=1 // pred_check
      _
    $region31: #{tpu_custom_call.1} parent=1 // pred_check_branch
      %633 = sbr.rel (0) target = $region33
    $region32: #{tpu_custom_call.1} parent=1 // pred_region
      %s635 = ssub.s32 1024, 1024
      %636 = vsyncadd [#allocation4], %s635
      %s637 = sshll.u32 [#allocation8], 4
      %s638 = int_to_ptr.vmem [resolvable:$true] %s637
      %643 = dma.vmem_to_hbm [thread:$0]  %s638, 1024, %s4, [#allocation4], 64, 64, 4
    $region33: #{tpu_custom_call.1} parent=1 // pred_fallthru
      _
    // Predicated region
    $region34: #{tpu_custom_call.1} parent=1 // pred_check
      _
    $region35: #{tpu_custom_call.1} parent=1 // pred_check_branch
      %645 = sbr.rel (0) target = $region37
    $region36: #{tpu_custom_call.1} parent=1 // pred_region
      %s647 = ssub.s32 1024, 1024
      %648 = vsyncadd [#allocation10], %s647
      %s649 = sshll.u32 [#allocation9], 4
      %s650 = int_to_ptr.vmem [resolvable:$true] %s649
      %655 = dma.vmem_to_hbm [thread:$0]  %s650, 1024, %s5, [#allocation10], 64, 64, 4
    $region37: #{tpu_custom_call.1} parent=1 // pred_fallthru
      _
    // Predicated region
    $region38: #{tpu_custom_call.1} parent=1 // pred_check
      _
    $region39: #{tpu_custom_call.1} parent=1 // pred_check_branch
      %657 = sbr.rel (0) target = $region41
    $region40: #{tpu_custom_call.1} parent=1 // pred_region
      %658 = dma.done [#allocation4], 1024
    $region41: #{tpu_custom_call.1} parent=1 // pred_fallthru
      _
    // Predicated region
    $region42: #{tpu_custom_call.1} parent=1 // pred_check
      _
    $region43: #{tpu_custom_call.1} parent=1 // pred_check_branch
      %660 = sbr.rel (0) target = $region45
    $region44: #{tpu_custom_call.1} parent=1 // pred_region
      %661 = dma.done [#allocation10], 1024
    $region45: #{tpu_custom_call.1} parent=1 // pred_fallthru
      _
    %662 = vsyncpa [#allocation3], 1
    %663 = vsyncpa [#allocation6], 1
    %664 = vsyncpa [#allocation4], 1
    %665 = vsyncpa [#allocation10], 1

</llo_original>
